<compile_context>
chip_gen: v7x
topology: tpu7x:2x2x1
jax: 0.10.0
libtpu: 0.0.40
codegen_flags: <defaults>
</compile_context>

<pallas_src>
import functools

import jax
import jax.numpy as jnp
from jax import lax
from jax.experimental import pallas as pl
from jax.experimental.pallas import tpu as pltpu


_PARAM_KEYS = ("w1", "b1", "w2", "b2", "w3", "b3")


def _round_up(x, m):
    return ((x + m - 1) // m) * m


# ---------------------------------------------------------------------------
# Kernel 1: fused critic MLP forward + reward clamp (one batch tile per step)
#   out[0, i*TM:(i+1)*TM] = clip(MLP(x_tile), min_r, max_r)   (lane-dense row)
# ---------------------------------------------------------------------------
def _critic_fwd_kernel(x_ref, w1_ref, b1_ref, w2_ref, b2_ref, w3_ref,
                       sc_ref, out_ref):
    # Layer 1: one MXU push against the fused (state_dim+action_dim, H) weight.
    h = jnp.dot(x_ref[...].astype(jnp.float32), w1_ref[...],
                preferred_element_type=jnp.float32)
    h = jnp.maximum(h + b1_ref[...], 0.0)                         # (TM, H) f32

    # Layer 2.
    h = jnp.dot(h, w2_ref[...], preferred_element_type=jnp.float32)
    h = jnp.maximum(h + b2_ref[...], 0.0)                         # (TM, H) f32

    # Layer 3, lane-dense: contract the LAST axes of (1, H) w3 and (TM, H) h.
    # The transpose is folded into the matmul (no XLU vxpose / VMEM copy) and
    # the result (1, TM) stores as an unmasked full-lane vst.
    q = lax.dot_general(w3_ref[...], h,
                        dimension_numbers=(((1,), (1,)), ((), ())),
                        preferred_element_type=jnp.float32)       # (1, TM)
    q = q + sc_ref[0]                                             # b3 (SMEM)
    out_ref[...] = jnp.clip(q, sc_ref[1], sc_ref[2])              # reward clamp


@functools.partial(jax.jit, static_argnames=("block_rows",))
def critic_forward(state, action, params, min_reward, max_reward, *,
                   block_rows=512):
    """Pallas-backed critic forward: Q(s, a) clipped to [min_reward, max_reward].

    state (B, state_dim), action (B, action_dim) in any float dtype (bf16
    halves the HBM traffic of the batch stream).  Returns (B, 1) float32.
    """
    if block_rows % 128 != 0:
        raise ValueError("block_rows must be a multiple of 128")

    # Wrapper-side concat (fuses under jit; only ~64 B/row) -> single streamed
    # operand, single layer-1 MXU push per grid step.
    x = jnp.concatenate([state, action], axis=-1)
    b, in_dim = x.shape

    # Tile selection: as large as possible (amortize ~0.35 us/step overhead),
    # but keep >= 2 tiles when the batch allows so the "parallel" grid axis can
    # be split across v7x's two TensorCores.
    tm = min(block_rows, max(128, _round_up(pl.cdiv(b, 2), 128)))
    num_tiles = pl.cdiv(b, tm)        # ragged last tile handled by Pallas masking

    w1, b1, w2, b2, w3, b3 = (params[k] for k in _PARAM_KEYS)

    # Runtime SMEM scalars: [b3, min_reward, max_reward] -> no (1,1) VMEM
    # operand, no recompile when the reward range changes.
    scalars = jnp.stack([
        b3.reshape(()).astype(jnp.float32),
        jnp.asarray(min_reward, jnp.float32),
        jnp.asarray(max_reward, jnp.float32),
    ])

    # Weights: full-array blocks with constant index_map -> loaded once and
    # kept VMEM-resident across the whole (pipelined) batch grid.
    def const(arr):
        return pl.BlockSpec(arr.shape, lambda i: (0, 0))

    out = pl.pallas_call(
        _critic_fwd_kernel,
        out_shape=jax.ShapeDtypeStruct((1, b), jnp.float32),
        grid=(num_tiles,),
        in_specs=[
            pl.BlockSpec((tm, in_dim), lambda i: (i, 0)),     # streamed batch tile
            const(w1), const(b1), const(w2), const(b2), const(w3),
            pl.BlockSpec(memory_space=pltpu.MemorySpace.SMEM),  # scalars
        ],
        out_specs=pl.BlockSpec((1, tm), lambda i: (0, i)),    # lane-dense Q row
        compiler_params=pltpu.CompilerParams(
            dimension_semantics=("parallel",)),               # megacore split on v7x
    )(x, w1, b1, w2, b2, w3, scalars)

    return out.reshape(b, 1)


# ---------------------------------------------------------------------------
# Kernel 2: fused soft update   target <- tau * local + (1 - tau) * target
#   One pallas_call for ALL parameter tensors, target buffers aliased in-place.
# ---------------------------------------------------------------------------
def _soft_update_kernel(*refs, tau, n):
    local_refs, target_refs, out_refs = refs[:n], refs[n:2 * n], refs[2 * n:]
    for l_ref, t_ref, o_ref in zip(local_refs, target_refs, out_refs):
        mixed = (tau * l_ref[...].astype(jnp.float32)
                 + (1.0 - tau) * t_ref[...].astype(jnp.float32))
        o_ref[...] = mixed.astype(o_ref.dtype)


@functools.partial(jax.jit, static_argnames=("tau",))
def soft_update(local_params, target_params, tau):
    """Polyak update of every parameter tensor in a single kernel launch."""
    locals_ = [local_params[k] for k in _PARAM_KEYS]
    targets = [target_params[k] for k in _PARAM_KEYS]
    n = len(_PARAM_KEYS)
    vmem = pl.BlockSpec(memory_space=pltpu.MemorySpace.VMEM)
    # TODO(synk): if parameter tensors grow to many MB, switch to a tiled grid
    #             with lane-dense blocks; note the whole-array-VMEM headroom on
    #             v7x (64 MiB total / ~32 MiB scoped) is half that of v5e/v6e.
    outs = pl.pallas_call(
        functools.partial(_soft_update_kernel, tau=float(tau), n=n),
        out_shape=tuple(jax.ShapeDtypeStruct(t.shape, t.dtype) for t in targets),
        in_specs=[vmem] * (2 * n),
        out_specs=tuple([vmem] * n),
        input_output_aliases={n + j: j for j in range(n)},   # update target in place
    )(*locals_, *targets)
    return dict(zip(_PARAM_KEYS, outs))


# ---------------------------------------------------------------------------
# Deterministic parameter construction (synthetic critic network)
# ---------------------------------------------------------------------------
def init_critic_params(key, state_dim, action_dim, hidden_dim,
                       dtype=jnp.float32):
    # f32 master copies: with tau=0.005 the Polyak delta in bf16 is often below
    # the target parameter's ulp and the update silently becomes a no-op.
    k1, k2, k3, k4, k5, k6 = jax.random.split(key, 6)
    in_dim = state_dim + action_dim
    s1 = 1.0 / float(in_dim) ** 0.5
    s2 = 1.0 / float(hidden_dim) ** 0.5

    def u(k, shape, s):
        return jax.random.uniform(k, shape, jnp.float32, -s, s).astype(dtype)

    return {
        "w1": u(k1, (in_dim, hidden_dim), s1),       # fused concat(state,action) weight
        "b1": u(k2, (1, hidden_dim), s1),
        "w2": u(k3, (hidden_dim, hidden_dim), s2),
        "b2": u(k4, (1, hidden_dim), s2),
        "w3": u(k5, (1, hidden_dim), s2),            # stored as a row (lane-dense output path)
        "b3": u(k6, (1, 1), s2),
    }


class QFitterBasePallas:
    """JAX/Pallas analogue of QFitterBase (inference-side utilities)."""

    def __init__(self, critic_params, critic_target_params,
                 min_reward, max_reward, tau=0.005):
        f32 = lambda t: jnp.asarray(t, jnp.float32)
        self.critic = jax.tree_util.tree_map(f32, critic_params)
        # PyTorch __init__ does soft_update(tau=1.0), i.e. a hard copy that
        # discards critic_target_params' values; do it as a plain device copy
        # instead of launching kernels for a memcpy.
        del critic_target_params
        self.critic_target = jax.tree_util.tree_map(jnp.copy, self.critic)
        self.tau = float(tau)
        self.min_reward = float(min_reward)
        self.max_reward = float(max_reward)
        # TODO(synk): AdamW optimizer, update(), save()/load(), set_device() omitted.

    def forward(self, state, action, use_target=False):
        params = self.critic_target if use_target else self.critic
        return critic_forward(state, action, params,
                              self.min_reward, self.max_reward)

    def do_soft_update(self):
        self.critic_target = soft_update(self.critic, self.critic_target, self.tau)


if __name__ == "__main__":
    key = jax.random.PRNGKey(0)
    k_local, k_target, k_state, k_action = jax.random.split(key, 4)

    batch = 200            # deliberately NOT a multiple of the batch tile
    state_dim = 24
    action_dim = 8
    hidden_dim = 128

    critic_params = init_critic_params(k_local, state_dim, action_dim, hidden_dim)
    other_params = init_critic_params(k_target, state_dim, action_dim, hidden_dim)

    fitter = QFitterBasePallas(critic_params, other_params,
                               min_reward=0.0, max_reward=1.0, tau=0.005)

    # bf16 batch stream (halves HBM bytes for the dominant streaming operand).
    state = jax.random.normal(k_state, (batch, state_dim), jnp.float32).astype(jnp.bfloat16)
    action = jax.random.normal(k_action, (batch, action_dim), jnp.float32).astype(jnp.bfloat16)

    q = fitter.forward(state, action, use_target=False)
    q_t = fitter.forward(state, action, use_target=True)
    jax.block_until_ready((q, q_t))

    assert q.shape == (batch, 1)
    # After the tau=1.0 hard copy in __init__, target == local exactly.
    assert jnp.allclose(q, q_t, atol=1e-5), "target hard copy mismatch"

    # Cross-check the fused forward kernel against a pure-JAX f32 reference.
    def ref_forward(p, s, a, lo, hi):
        x = jnp.concatenate([s, a], axis=-1).astype(jnp.float32)
        h1 = jnp.maximum(x @ p["w1"] + p["b1"], 0.0)
        h2 = jnp.maximum(h1 @ p["w2"] + p["b2"], 0.0)
        qq = h2 @ p["w3"].T + p["b3"]
        return jnp.clip(qq, lo, hi)

    q_ref = ref_forward(fitter.critic, state, action, 0.0, 1.0)
    max_err = float(jnp.max(jnp.abs(q - q_ref)))
    assert jnp.allclose(q, q_ref, atol=1e-2, rtol=1e-2), f"critic forward mismatch: {max_err}"

    # Exercise the fused, aliased soft update against an independent target.
    fitter.critic_target = jax.tree_util.tree_map(
        lambda t: jnp.asarray(t, jnp.float32), other_params)
    old_target = jax.tree_util.tree_map(jnp.copy, fitter.critic_target)
    fitter.do_soft_update()
    for k in _PARAM_KEYS:
        want = (fitter.tau * jnp.asarray(fitter.critic[k], jnp.float32)
                + (1.0 - fitter.tau) * jnp.asarray(old_target[k], jnp.float32))
        got = jnp.asarray(fitter.critic_target[k], jnp.float32)
        assert jnp.allclose(got, want, atol=1e-6, rtol=1e-6), \
            f"soft update mismatch on {k}"

    # Target forward after the soft update (shape / run sanity).
    q_t2 = fitter.forward(state, action, use_target=True)
    jax.block_until_ready(q_t2)
    assert q_t2.shape == (batch, 1)

    print("KERNEL_OK")
</pallas_src>

<mosaic_0001>
module attributes {stable_mosaic.version = 11 : i64} {
  func.func @_critic_fwd_kernel(%arg0: i32, %arg1: memref<128x32xbf16, #tpu.memory_space<vmem>>, %arg2: memref<32x128xf32, #tpu.memory_space<vmem>>, %arg3: memref<1x128xf32, #tpu.memory_space<vmem>>, %arg4: memref<128x128xf32, #tpu.memory_space<vmem>>, %arg5: memref<1x128xf32, #tpu.memory_space<vmem>>, %arg6: memref<1x128xf32, #tpu.memory_space<vmem>>, %arg7: memref<3xf32, #tpu.memory_space<smem>>, %arg8: memref<1x128xf32, #tpu.memory_space<vmem>>) attributes {dimension_semantics = [#tpu.dimension_semantics<parallel>], iteration_bounds = array<i64: 2>, scalar_prefetch = 0 : i64, scratch_operands = 0 : i64, tpu.core_type = #tpu.core_type<tc>, window_params = [{transform_indices = @transform_0, window_bounds = array<i64: 128, 32>}, {pipeline_mode = #tpu.pipeline_mode<synchronous>, transform_indices = @transform_1, window_bounds = array<i64: 32, 128>}, {pipeline_mode = #tpu.pipeline_mode<synchronous>, transform_indices = @transform_2, window_bounds = array<i64: 1, 128>}, {pipeline_mode = #tpu.pipeline_mode<synchronous>, transform_indices = @transform_3, window_bounds = array<i64: 128, 128>}, {pipeline_mode = #tpu.pipeline_mode<synchronous>, transform_indices = @transform_4, window_bounds = array<i64: 1, 128>}, {pipeline_mode = #tpu.pipeline_mode<synchronous>, transform_indices = @transform_5, window_bounds = array<i64: 1, 128>}, {transform_indices = @transform_6, window_bounds = array<i64: 3>}, {transform_indices = @transform_7, window_bounds = array<i64: 1, 128>}]} {
    %c0 = arith.constant 0 : index
    %c0_0 = arith.constant 0 : index
    %0 = vector.load %arg1[%c0, %c0_0] : memref<128x32xbf16, #tpu.memory_space<vmem>>, vector<128x32xbf16>
    %1 = arith.extf %0 : vector<128x32xbf16> to vector<128x32xf32>
    %c0_1 = arith.constant 0 : index
    %c0_2 = arith.constant 0 : index
    %2 = vector.load %arg2[%c0_1, %c0_2] : memref<32x128xf32, #tpu.memory_space<vmem>>, vector<32x128xf32>
    %cst = arith.constant dense<0.000000e+00> : vector<128x128xf32>
    %3 = tpu.matmul %1, %2, %cst {dimension_numbers = #tpu.dot_dimension_numbers<[1], [0], [0], [1], [0, 0, 1, 1], [], []>} : vector<128x32xf32>, vector<32x128xf32>, vector<128x128xf32> -> vector<128x128xf32>
    %c0_3 = arith.constant 0 : index
    %c0_4 = arith.constant 0 : index
    %4 = vector.load %arg3[%c0_3, %c0_4] : memref<1x128xf32, #tpu.memory_space<vmem>>, vector<1x128xf32>
    %5 = vector.broadcast %4 : vector<1x128xf32> to vector<128x128xf32>
    %6 = arith.addf %3, %5 : vector<128x128xf32>
    %cst_5 = arith.constant 0.000000e+00 : f32
    %7 = vector.broadcast %cst_5 : f32 to vector<128x128xf32>
    %8 = arith.maximumf %6, %7 : vector<128x128xf32>
    %c0_6 = arith.constant 0 : index
    %c0_7 = arith.constant 0 : index
    %9 = vector.load %arg4[%c0_6, %c0_7] : memref<128x128xf32, #tpu.memory_space<vmem>>, vector<128x128xf32>
    %cst_8 = arith.constant dense<0.000000e+00> : vector<128x128xf32>
    %10 = tpu.matmul %8, %9, %cst_8 {dimension_numbers = #tpu.dot_dimension_numbers<[1], [0], [0], [1], [0, 0, 1, 1], [], []>} : vector<128x128xf32>, vector<128x128xf32>, vector<128x128xf32> -> vector<128x128xf32>
    %c0_9 = arith.constant 0 : index
    %c0_10 = arith.constant 0 : index
    %11 = vector.load %arg5[%c0_9, %c0_10] : memref<1x128xf32, #tpu.memory_space<vmem>>, vector<1x128xf32>
    %12 = vector.broadcast %11 : vector<1x128xf32> to vector<128x128xf32>
    %13 = arith.addf %10, %12 : vector<128x128xf32>
    %cst_11 = arith.constant 0.000000e+00 : f32
    %14 = vector.broadcast %cst_11 : f32 to vector<128x128xf32>
    %15 = arith.maximumf %13, %14 : vector<128x128xf32>
    %c0_12 = arith.constant 0 : index
    %c0_13 = arith.constant 0 : index
    %16 = vector.load %arg6[%c0_12, %c0_13] : memref<1x128xf32, #tpu.memory_space<vmem>>, vector<1x128xf32>
    %cst_14 = arith.constant dense<0.000000e+00> : vector<1x128xf32>
    %17 = tpu.matmul %16, %15, %cst_14 {dimension_numbers = #tpu.dot_dimension_numbers<[1], [1], [0], [0], [0, 0, 1, 0], [], []>} : vector<1x128xf32>, vector<128x128xf32>, vector<1x128xf32> -> vector<1x128xf32>
    %c0_15 = arith.constant 0 : index
    %18 = memref.load %arg7[%c0_15] : memref<3xf32, #tpu.memory_space<smem>>
    %19 = vector.broadcast %18 : f32 to vector<1x128xf32>
    %20 = arith.addf %17, %19 : vector<1x128xf32>
    %c1 = arith.constant 1 : index
    %21 = memref.load %arg7[%c1] : memref<3xf32, #tpu.memory_space<smem>>
    %c2 = arith.constant 2 : index
    %22 = memref.load %arg7[%c2] : memref<3xf32, #tpu.memory_space<smem>>
    %23 = vector.broadcast %21 : f32 to vector<1x128xf32>
    %24 = arith.maximumf %23, %20 : vector<1x128xf32>
    %25 = vector.broadcast %22 : f32 to vector<1x128xf32>
    %26 = arith.minimumf %25, %24 : vector<1x128xf32>
    %c0_16 = arith.constant 0 : index
    %c0_17 = arith.constant 0 : index
    %27 = vector.load %arg8[%c0_16, %c0_17] : memref<1x128xf32, #tpu.memory_space<vmem>>, vector<1x128xf32>
    tpu.vector_store %arg8[%c0_16, %c0_17], %26 {strides = array<i32>} : memref<1x128xf32, #tpu.memory_space<vmem>>, vector<1x128xf32>,
    return
  }
  func.func @transform_0(%arg0: i32) -> (i32, i32) {
    %c0_i32 = arith.constant 0 : i32
    %c0_i32_0 = arith.constant 0 : i32
    return %arg0, %c0_i32 : i32, i32
  }
  func.func @transform_1(%arg0: i32) -> (i32, i32) {
    %c0_i32 = arith.constant 0 : i32
    %c0_i32_0 = arith.constant 0 : i32
    %c0_i32_1 = arith.constant 0 : i32
    return %c0_i32, %c0_i32_0 : i32, i32
  }
  func.func @transform_2(%arg0: i32) -> (i32, i32) {
    %c0_i32 = arith.constant 0 : i32
    %c0_i32_0 = arith.constant 0 : i32
    %c0_i32_1 = arith.constant 0 : i32
    return %c0_i32, %c0_i32_0 : i32, i32
  }
  func.func @transform_3(%arg0: i32) -> (i32, i32) {
    %c0_i32 = arith.constant 0 : i32
    %c0_i32_0 = arith.constant 0 : i32
    %c0_i32_1 = arith.constant 0 : i32
    return %c0_i32, %c0_i32_0 : i32, i32
  }
  func.func @transform_4(%arg0: i32) -> (i32, i32) {
    %c0_i32 = arith.constant 0 : i32
    %c0_i32_0 = arith.constant 0 : i32
    %c0_i32_1 = arith.constant 0 : i32
    return %c0_i32, %c0_i32_0 : i32, i32
  }
  func.func @transform_5(%arg0: i32) -> (i32, i32) {
    %c0_i32 = arith.constant 0 : i32
    %c0_i32_0 = arith.constant 0 : i32
    %c0_i32_1 = arith.constant 0 : i32
    return %c0_i32, %c0_i32_0 : i32, i32
  }
  func.func @transform_6(%arg0: i32) -> i32 {
    %c0_i32 = arith.constant 0 : i32
    %c0_i32_0 = arith.constant 0 : i32
    return %c0_i32 : i32
  }
  func.func @transform_7(%arg0: i32) -> (i32, i32) {
    %c0_i32 = arith.constant 0 : i32
    %c0_i32_0 = arith.constant 0 : i32
    return %c0_i32, %arg0 : i32, i32
  }
}

</mosaic_0001>

<llo_original>
// kernel: critic_forward.1
$region0: #{critic_forward.1}
  #allocation0 [shape = 'u32[]', space=smem, size = 0x4, offset = 0x4, fixed_abs, tag = 'smem constant byte address 0x4 - core index']
  #allocation1 [shape = 'u32[144,128]{1,0:T(1,128)}', space=vmem, size = 0x12000, scoped, tag = 'internal scratch']
  %s0 = inlined_call_operand.vmem [shape: bf16[200,32], index: 0, kind: input, shape index: {}]
  %s1 = inlined_call_operand.vmem [shape: f32[32,128], index: 1, kind: input, shape index: {}]
  %s2 = inlined_call_operand.vmem [shape: f32[1,128], index: 2, kind: input, shape index: {}]
  %s3 = inlined_call_operand.vmem [shape: f32[128,128], index: 3, kind: input, shape index: {}]
  %s4 = inlined_call_operand.vmem [shape: f32[1,128], index: 4, kind: input, shape index: {}]
  %s5 = inlined_call_operand.vmem [shape: f32[1,128], index: 5, kind: input, shape index: {}]
  %s6 = inlined_call_operand.vmem [shape: f32[3], index: 6, kind: input, shape index: {}]
  %s7 = inlined_call_operand.hbm [shape: f32[1,200], index: 7, kind: output, shape index: {}]
  %s8 = sld [smem:[#allocation0]]
  $region65: #{critic_forward.1} parent=0
    _
  %s10 = ssub.s32 1, %s8
  %s11 = scalar_select 0, %s10, %s8
  $region1: #{critic_forward.1} parent=0
    #allocation2 [shape = 'u8[512]{0}', space=smem, size = 0x200, scoped, tag = 'input window, operand 6, single buffered']
    #allocation3 [shape = 's32[2]{0}', space=sflag, size = 0x8, scoped, tag = 'scoped memory for critic_forward.1']
    #allocation4 [shape = 's32[2]{0}', space=sflag, size = 0x8, scoped, tag = 'scoped memory for critic_forward.1']
    #allocation5 [shape = 'u8[1024]{0}', space=vmem, size = 0x400, scoped, tag = 'output window, operand 0']
    %12 = vsyncpa [#allocation4], 0
    %13 = vsyncpa [#allocation3], 0
    %s14 = scalar_lea.sflag [#allocation3], 1
    %15 = vsyncpa %s14, 0
    loop: start=0, step=1, limit=4
    $region2: #{critic_forward.1} parent=1 // loop_pre_header
      _
    $region3: #{critic_forward.1} parent=1 // loop_header
      %s17 = sphi 0, %s21
      %p18 = scmp.ge.s32.totalorder %s17, 4
      %s27 = sphi 0, %s29
      %s30 = sphi 0, %s27
      %s31 = sphi 0, %s30
      %s47 = sphi 0, %s31
      %s51 = sphi 0, %s51
      %s53 = sphi 0, %s51
      %s54 = sphi 0, %s53
      %s68 = sphi 0, %s54
      %s72 = sphi 0, %s72
      %s74 = sphi 0, %s72
      %s75 = sphi 0, %s74
      %s89 = sphi 0, %s75
      %s93 = sphi 0, %s93
      %s95 = sphi 0, %s93
      %s96 = sphi 0, %s95
      %s110 = sphi 0, %s96
      %s114 = sphi 0, %s114
      %s116 = sphi 0, %s114
      %s117 = sphi 0, %s116
      %s131 = sphi 0, %s117
      %s135 = sphi 0, %s135
      %s137 = sphi 0, %s135
      %s138 = sphi 0, %s137
      %s152 = sphi 0, %s138
      %s156 = sphi 0, %s156
      %s158 = sphi 0, %s156
      %s159 = sphi 0, %s158
      %s173 = sphi 0, %s159
      %s179 = sphi 0, %s181
      %s182 = sphi 0, %s179
      %s183 = sphi 0, %s182
      %s199 = sphi 0, %s183
    $region4: #{critic_forward.1} parent=1 // loop_header_branch
      %20 = sbr.rel (%p18) target = $region8
    $region5: #{critic_forward.1} parent=1 // loop_body
      %s22 = ssub.s32 %s17, 1
      %s23 = ssub.s32 %s17, 2
      %s24 = sadd.s32 %s17, 1
      %s25 = ssub.s32 %s17, %s24
      %p26 = scmp.eq.s32.totalorder %s25, 0
      %s28 = sadd.s32 %s27, 1
      %s29 = scalar_select %p26, %s27, %s28
      %p32 = pneg %p26
      %p33 = scmp.eq.s32.totalorder %s17, 1
      %p34 = por %p32, %p33
      %p35 = scmp.ne.s32.totalorder %s27, %s30
      %p36 = scmp.eq.s32.totalorder %s17, 0
      %p37 = por %p35, %p36
      %p38 = scmp.ne.s32.totalorder %s27, %s30
      %p39 = scmp.eq.s32.totalorder %s22, 1
      %p40 = por %p38, %p39
      %p41 = scmp.ne.s32.totalorder %s30, %s31
      %p42 = scmp.eq.s32.totalorder %s22, 0
      %p43 = por %p41, %p42
      %p44 = scmp.ne.s32.totalorder %s30, %s31
      %p45 = scmp.eq.s32.totalorder %s23, 1
      %p46 = por %p44, %p45
      %p48 = scmp.ne.s32.totalorder %s31, %s47
      %p49 = scmp.eq.s32.totalorder %s23, 0
      %p50 = por %p48, %p49
      %s52 = sadd.s32 %s51, 1
      %p55 = scmp.eq.s32.totalorder %s17, 1
      %p56 = scmp.ne.s32.totalorder %s51, %s53
      %p57 = scmp.eq.s32.totalorder %s17, 0
      %p58 = por %p56, %p57
      %p59 = scmp.ne.s32.totalorder %s51, %s53
      %p60 = scmp.eq.s32.totalorder %s22, 1
      %p61 = por %p59, %p60
      %p62 = scmp.ne.s32.totalorder %s53, %s54
      %p63 = scmp.eq.s32.totalorder %s22, 0
      %p64 = por %p62, %p63
      %p65 = scmp.ne.s32.totalorder %s53, %s54
      %p66 = scmp.eq.s32.totalorder %s23, 1
      %p67 = por %p65, %p66
      %p69 = scmp.ne.s32.totalorder %s54, %s68
      %p70 = scmp.eq.s32.totalorder %s23, 0
      %p71 = por %p69, %p70
      %s73 = sadd.s32 %s72, 1
      %p76 = scmp.eq.s32.totalorder %s17, 1
      %p77 = scmp.ne.s32.totalorder %s72, %s74
      %p78 = scmp.eq.s32.totalorder %s17, 0
      %p79 = por %p77, %p78
      %p80 = scmp.ne.s32.totalorder %s72, %s74
      %p81 = scmp.eq.s32.totalorder %s22, 1
      %p82 = por %p80, %p81
      %p83 = scmp.ne.s32.totalorder %s74, %s75
      %p84 = scmp.eq.s32.totalorder %s22, 0
      %p85 = por %p83, %p84
      %p86 = scmp.ne.s32.totalorder %s74, %s75
      %p87 = scmp.eq.s32.totalorder %s23, 1
      %p88 = por %p86, %p87
      %p90 = scmp.ne.s32.totalorder %s75, %s89
      %p91 = scmp.eq.s32.totalorder %s23, 0
      %p92 = por %p90, %p91
      %s94 = sadd.s32 %s93, 1
      %p97 = scmp.eq.s32.totalorder %s17, 1
      %p98 = scmp.ne.s32.totalorder %s93, %s95
      %p99 = scmp.eq.s32.totalorder %s17, 0
      %p100 = por %p98, %p99
      %p101 = scmp.ne.s32.totalorder %s93, %s95
      %p102 = scmp.eq.s32.totalorder %s22, 1
      %p103 = por %p101, %p102
      %p104 = scmp.ne.s32.totalorder %s95, %s96
      %p105 = scmp.eq.s32.totalorder %s22, 0
      %p106 = por %p104, %p105
      %p107 = scmp.ne.s32.totalorder %s95, %s96
      %p108 = scmp.eq.s32.totalorder %s23, 1
      %p109 = por %p107, %p108
      %p111 = scmp.ne.s32.totalorder %s96, %s110
      %p112 = scmp.eq.s32.totalorder %s23, 0
      %p113 = por %p111, %p112
      %s115 = sadd.s32 %s114, 1
      %p118 = scmp.eq.s32.totalorder %s17, 1
      %p119 = scmp.ne.s32.totalorder %s114, %s116
      %p120 = scmp.eq.s32.totalorder %s17, 0
      %p121 = por %p119, %p120
      %p122 = scmp.ne.s32.totalorder %s114, %s116
      %p123 = scmp.eq.s32.totalorder %s22, 1
      %p124 = por %p122, %p123
      %p125 = scmp.ne.s32.totalorder %s116, %s117
      %p126 = scmp.eq.s32.totalorder %s22, 0
      %p127 = por %p125, %p126
      %p128 = scmp.ne.s32.totalorder %s116, %s117
      %p129 = scmp.eq.s32.totalorder %s23, 1
      %p130 = por %p128, %p129
      %p132 = scmp.ne.s32.totalorder %s117, %s131
      %p133 = scmp.eq.s32.totalorder %s23, 0
      %p134 = por %p132, %p133
      %s136 = sadd.s32 %s135, 1
      %p139 = scmp.eq.s32.totalorder %s17, 1
      %p140 = scmp.ne.s32.totalorder %s135, %s137
      %p141 = scmp.eq.s32.totalorder %s17, 0
      %p142 = por %p140, %p141
      %p143 = scmp.ne.s32.totalorder %s135, %s137
      %p144 = scmp.eq.s32.totalorder %s22, 1
      %p145 = por %p143, %p144
      %p146 = scmp.ne.s32.totalorder %s137, %s138
      %p147 = scmp.eq.s32.totalorder %s22, 0
      %p148 = por %p146, %p147
      %p149 = scmp.ne.s32.totalorder %s137, %s138
      %p150 = scmp.eq.s32.totalorder %s23, 1
      %p151 = por %p149, %p150
      %p153 = scmp.ne.s32.totalorder %s138, %s152
      %p154 = scmp.eq.s32.totalorder %s23, 0
      %p155 = por %p153, %p154
      %s157 = sadd.s32 %s156, 1
      %p160 = scmp.eq.s32.totalorder %s17, 1
      %p161 = scmp.ne.s32.totalorder %s156, %s158
      %p162 = scmp.eq.s32.totalorder %s17, 0
      %p163 = por %p161, %p162
      %p164 = scmp.ne.s32.totalorder %s156, %s158
      %p165 = scmp.eq.s32.totalorder %s22, 1
      %p166 = por %p164, %p165
      %p167 = scmp.ne.s32.totalorder %s158, %s159
      %p168 = scmp.eq.s32.totalorder %s22, 0
      %p169 = por %p167, %p168
      %p170 = scmp.ne.s32.totalorder %s158, %s159
      %p171 = scmp.eq.s32.totalorder %s23, 1
      %p172 = por %p170, %p171
      %p174 = scmp.ne.s32.totalorder %s159, %s173
      %p175 = scmp.eq.s32.totalorder %s23, 0
      %p176 = por %p174, %p175
      %s177 = ssub.s32 %s17, %s24
      %p178 = scmp.eq.s32.totalorder %s177, 0
      %s180 = sadd.s32 %s179, 1
      %s181 = scalar_select %p178, %s179, %s180
      %p184 = pneg %p178
      %p185 = scmp.eq.s32.totalorder %s17, 1
      %p186 = por %p184, %p185
      %p187 = scmp.ne.s32.totalorder %s179, %s182
      %p188 = scmp.eq.s32.totalorder %s17, 0
      %p189 = por %p187, %p188
      %p190 = scmp.ne.s32.totalorder %s179, %s182
      %p191 = scmp.eq.s32.totalorder %s22, 1
      %p192 = por %p190, %p191
      %p193 = scmp.ne.s32.totalorder %s182, %s183
      %p194 = scmp.eq.s32.totalorder %s22, 0
      %p195 = por %p193, %p194
      %p196 = scmp.ne.s32.totalorder %s182, %s183
      %p197 = scmp.eq.s32.totalorder %s23, 1
      %p198 = por %p196, %p197
      %p200 = scmp.ne.s32.totalorder %s183, %s199
      %p201 = scmp.eq.s32.totalorder %s23, 0
      %p202 = por %p200, %p201
      %p203 = scmp.le.s32.totalorder 1, %s17
      %p204 = scmp.lt.s32.totalorder %s17, 3
      %p205 = pnand %p203, %p204
      %p206 = pneg %p205
      // Predicated region
      $region9: #{critic_forward.1} parent=5 // pred_check
        _
      $region10: #{critic_forward.1} parent=5 // pred_check_branch
        %208 = sbr.rel (%p205) target = $region12
      $region11: #{critic_forward.1} parent=5 // pred_region
        %s209 = ssub.s32 %s17, 1
        // Predicated region
        $region13: #{critic_forward.1} parent=11 // pred_check
          %p210 = pneg %p64
        $region14: #{critic_forward.1} parent=11 // pred_check_branch
          %212 = sbr.rel (%p210) target = $region16
        $region15: #{critic_forward.1} parent=11 // pred_region
          _
        $region16: #{critic_forward.1} parent=11 // pred_fallthru
          _
        // Predicated region
        $region17: #{critic_forward.1} parent=11 // pred_check
          %p213 = pneg %p85
        $region18: #{critic_forward.1} parent=11 // pred_check_branch
          %215 = sbr.rel (%p213) target = $region20
        $region19: #{critic_forward.1} parent=11 // pred_region
          _
        $region20: #{critic_forward.1} parent=11 // pred_fallthru
          _
        // Predicated region
        $region21: #{critic_forward.1} parent=11 // pred_check
          %p216 = pneg %p106
        $region22: #{critic_forward.1} parent=11 // pred_check_branch
          %218 = sbr.rel (%p216) target = $region24
        $region23: #{critic_forward.1} parent=11 // pred_region
          _
        $region24: #{critic_forward.1} parent=11 // pred_fallthru
          _
        // Predicated region
        $region25: #{critic_forward.1} parent=11 // pred_check
          %p219 = pneg %p127
        $region26: #{critic_forward.1} parent=11 // pred_check_branch
          %221 = sbr.rel (%p219) target = $region28
        $region27: #{critic_forward.1} parent=11 // pred_region
          _
        $region28: #{critic_forward.1} parent=11 // pred_fallthru
          _
        // Predicated region
        $region29: #{critic_forward.1} parent=11 // pred_check
          %p222 = pneg %p148
        $region30: #{critic_forward.1} parent=11 // pred_check_branch
          %224 = sbr.rel (%p222) target = $region32
        $region31: #{critic_forward.1} parent=11 // pred_region
          _
        $region32: #{critic_forward.1} parent=11 // pred_fallthru
          _
        // Predicated region
        $region33: #{critic_forward.1} parent=11 // pred_check
          %p225 = pneg %p169
        $region34: #{critic_forward.1} parent=11 // pred_check_branch
          %227 = sbr.rel (%p225) target = $region36
        $region35: #{critic_forward.1} parent=11 // pred_region
          %s229 = ssub.s32 16, 16
          %230 = vsyncadd [#allocation4], %s229
          %s232 = sshll.u32 %s6, 4
          %s233 = int_to_ptr.vmem [resolvable:$true] %s232
          %235 = dma.vmem_to_smem %s233, 16, [#allocation2], [#allocation4]
        $region36: #{critic_forward.1} parent=11 // pred_fallthru
          _
      $region12: #{critic_forward.1} parent=5 // pred_fallthru
        _
      %p236 = scmp.lt.s32.totalorder %s17, 2
      // Predicated region
      $region37: #{critic_forward.1} parent=5 // pred_check
        %p237 = pneg %p236
      $region38: #{critic_forward.1} parent=5 // pred_check_branch
        %239 = sbr.rel (%p237) target = $region40
      $region39: #{critic_forward.1} parent=5 // pred_region
        // Predicated region
        $region41: #{critic_forward.1} parent=39 // pred_check
          %p240 = pneg %p37
        $region42: #{critic_forward.1} parent=39 // pred_check_branch
          %242 = sbr.rel (%p240) target = $region44
        $region43: #{critic_forward.1} parent=39 // pred_region
          %s243 = smul.u32 16, %s17
          %s244 = ssub.s32 25, %s243
          %p245 = scmp.lt.s32.totalorder %s244, 16
          %s246 = scalar_select %p245, %s244, 16
          %s247 = smul.u32 64, %s246
          %p248 = scmp.lt.s32.totalorder %s243, 24
          %s249 = scalar_select %p248, %s243, 24
          %s250 = smul.addr %s249, 4
          %s251 = scalar_lea.vmem %s0, %s250
          %s252 = smul.u32 16, %s17
          %s253 = ssub.s32 25, %s252
          %p254 = scmp.lt.s32.totalorder %s253, 16
          %s255 = scalar_select %p254, %s253, 16
          %s256 = smul.u32 64, %s255
        $region44: #{critic_forward.1} parent=39 // pred_fallthru
          _
      $region40: #{critic_forward.1} parent=5 // pred_fallthru
        _
      %p257 = scmp.le.s32.totalorder 1, %s17
      %p258 = scmp.lt.s32.totalorder %s17, 3
      %p259 = pnand %p257, %p258
      %p260 = pneg %p259
      // Predicated region
      $region45: #{critic_forward.1} parent=5 // pred_check
        _
      $region46: #{critic_forward.1} parent=5 // pred_check_branch
        %262 = sbr.rel (%p259) target = $region48
      $region47: #{critic_forward.1} parent=5 // pred_region
        %s263 = ssub.s32 %s17, 1
        // Predicated region
        $region49: #{critic_forward.1} parent=47 // pred_check
          %p264 = pneg %p169
        $region50: #{critic_forward.1} parent=47 // pred_check_branch
          %266 = sbr.rel (%p264) target = $region52
        $region51: #{critic_forward.1} parent=47 // pred_region
          %267 = dma.done [#allocation4], 16
        $region52: #{critic_forward.1} parent=47 // pred_fallthru
          _
        %268 = sfence
        %s269 = smul.u32 16, %s22
        %s270 = ssub.s32 25, %s269
        %p271 = scmp.lt.s32.totalorder %s270, 16
        %s272 = scalar_select %p271, %s270, 16
        %s273 = smul.u32 64, %s272
        %p274 = scmp.lt.s32.totalorder %s269, 24
        %s275 = scalar_select %p274, %s269, 24
        %s276 = smul.addr %s275, 4
        %s277 = scalar_lea.vmem %s0, %s276
        %p278 = pneg %p43
        %p279 = pneg %p40
        %p280 = pneg %p64
        %p281 = pneg %p61
        %p282 = pneg %p85
        %p283 = pneg %p82
        %p284 = pneg %p106
        %p285 = pneg %p103
        %p286 = pneg %p127
        %p287 = pneg %p124
        %p288 = pneg %p148
        %p289 = pneg %p145
        %p290 = pneg %p169
        %p291 = pneg %p166
        %p292 = pneg %p195
        %p293 = pneg %p192
        %s294 = sand.u32 %s182, 1
        %s295 = scalar_lea.sflag [#allocation3], %s294
        %s296 = sand.u32 %s182, 1
        %s297 = scalar_lea.vmem [#allocation5], %s296
        %s298 = smul.u32 16, %s22
        %s299 = ssub.s32 25, %s298
        %p300 = scmp.lt.s32.totalorder %s299, 16
        %s301 = scalar_select %p300, %s299, 16
        %s302 = smul.u32 64, %s301
        %p303 = scmp.lt.s32.totalorder %s298, 24
        %s304 = scalar_select %p303, %s298, 24
        %s305 = smul.addr %s304, 4
        %s306 = scalar_lea.vmem %s0, %s305
        %s307 = smul.u32 16, %s22
        %s308 = ssub.s32 25, %s307
        %p309 = scmp.lt.s32.totalorder %s308, 16
        %s310 = scalar_select %p309, %s308, 16
        %s311 = smul.u32 64, %s310
        %v312 = vld [vmem:[%s306] sm:$0xf]
        %v313 = vld [vmem:[%s306 + $0x4] sm:$0xf]
        %v314 = vld [vmem:[%s306 + $0x8] sm:$0xf]
        %v315 = vld [vmem:[%s306 + $0xc] sm:$0xf]
        %v316 = vld [vmem:[%s306 + $0x10] sm:$0xf]
        %v317 = vld [vmem:[%s306 + $0x14] sm:$0xf]
        %v318 = vld [vmem:[%s306 + $0x18] sm:$0xf]
        %v319 = vld [vmem:[%s306 + $0x1c] sm:$0xf]
        %v320 = vld [vmem:[%s306 + $0x20] sm:$0xf]
        %v321 = vld [vmem:[%s306 + $0x24] sm:$0xf]
        %v322 = vld [vmem:[%s306 + $0x28] sm:$0xf]
        %v323 = vld [vmem:[%s306 + $0x2c] sm:$0xf]
        %v324 = vld [vmem:[%s306 + $0x30] sm:$0xf]
        %v325 = vld [vmem:[%s306 + $0x34] sm:$0xf]
        %v326 = vld [vmem:[%s306 + $0x38] sm:$0xf]
        %v327 = vld [vmem:[%s306 + $0x3c] sm:$0xf]
        %v328 = vunpack.c.l.bf16 %v312
        %v329 = vunpack.c.l.bf16 %v313
        %v330 = vunpack.c.l.bf16 %v314
        %v331 = vunpack.c.l.bf16 %v315
        %v332 = vunpack.c.l.bf16 %v316
        %v333 = vunpack.c.l.bf16 %v317
        %v334 = vunpack.c.l.bf16 %v318
        %v335 = vunpack.c.l.bf16 %v319
        %v336 = vunpack.c.l.bf16 %v320
        %v337 = vunpack.c.l.bf16 %v321
        %v338 = vunpack.c.l.bf16 %v322
        %v339 = vunpack.c.l.bf16 %v323
        %v340 = vunpack.c.l.bf16 %v324
        %v341 = vunpack.c.l.bf16 %v325
        %v342 = vunpack.c.l.bf16 %v326
        %v343 = vunpack.c.l.bf16 %v327
        %v344 = vld [vmem:[%s1] sm:$0xff]
        %v345 = vld [vmem:[%s1 + $0x8] sm:$0xff]
        %v346 = vld [vmem:[%s1 + $0x10] sm:$0xff]
        %v347 = vld [vmem:[%s1 + $0x18] sm:$0xff]
        %v348 = vld [vmem:[%s2] sm:$0x1]
        %v350 = vlaneseq
        %v351 = vshrl.u32 %v350, 7
        %v352 = vsub.s32 0, %v351
        %v353 = vrot.slane %v348, %v352
        %vm355 = vcmask 261120
        %v357 = vsel %vm355, %v328, 0
        %v360 = vsel %vm355, %v329, 0
        %v363 = vsel %vm355, %v330, 0
        %v366 = vsel %vm355, %v331, 0
        %v369 = vsel %vm355, %v332, 0
        %v372 = vsel %vm355, %v333, 0
        %v375 = vsel %vm355, %v334, 0
        %v378 = vsel %vm355, %v335, 0
        %v381 = vsel %vm355, %v336, 0
        %v384 = vsel %vm355, %v337, 0
        %v387 = vsel %vm355, %v338, 0
        %v390 = vsel %vm355, %v339, 0
        %v393 = vsel %vm355, %v340, 0
        %v396 = vsel %vm355, %v341, 0
        %v399 = vsel %vm355, %v342, 0
        %v402 = vsel %vm355, %v343, 0
        %404 = vmatprep.subr.mxu0 0.0
        %405 = vmatpush1.msra.mxu0 %v344
        %406 = vmatprep.subr.mxu0 0.0
        %407 = vmatpush1.msra.mxu0 %v345
        %408 = vmatprep.subr.mxu0 0.0
        %409 = vmatpush1.msra.mxu0 %v346
        %410 = vmatprep.subr.mxu0 0.0
        %411 = vmatpush1.msra.mxu0 %v347
        %412 = vmatprep.subr.mxu0 0.0
        %413 = vmatpush1.msra.mxu0 0.0
        %414 = vmatprep.subr.mxu0 0.0
        %415 = vmatpush1.msra.mxu0 0.0
        %416 = vmatprep.subr.mxu0 0.0
        %417 = vmatpush1.msra.mxu0 0.0
        %418 = vmatprep.subr.mxu0 0.0
        %419 = vmatpush1.msra.mxu0 0.0
        %420 = vmatprep.subr.mxu0 0.0
        %421 = vmatpush1.msra.mxu0 0.0
        %422 = vmatprep.subr.mxu0 0.0
        %423 = vmatpush1.msra.mxu0 0.0
        %424 = vmatprep.subr.mxu0 0.0
        %425 = vmatpush1.msra.mxu0 0.0
        %426 = vmatprep.subr.mxu0 0.0
        %427 = vmatpush1.msra.mxu0 0.0
        %428 = vmatprep.subr.mxu0 0.0
        %429 = vmatpush1.msra.mxu0 0.0
        %430 = vmatprep.subr.mxu0 0.0
        %431 = vmatpush1.msra.mxu0 0.0
        %432 = vmatprep.subr.mxu0 0.0
        %433 = vmatpush1.msra.mxu0 0.0
        %434 = vmatprep.subr.mxu0 0.0
        %435 = vmatpush1.msra.mxu0 0.0
        %436 = vmatprep.subr.mxu0 0.0
        %437 = vmatpush1.msra.mxu0 0.0
        %438 = vmatprep.subr.mxu0 0.0
        %439 = vmatpush1.msra.mxu0 0.0
        %440 = vmatprep.subr.mxu0 0.0
        %441 = vmatpush1.msra.mxu0 0.0
        %442 = vmatprep.subr.mxu0 0.0
        %443 = vmatpush1.msra.mxu0 0.0
        %444 = vmatprep.subr.mxu0 0.0
        %445 = vmatpush1.msra.mxu0 0.0
        %446 = vmatprep.subr.mxu0 0.0
        %447 = vmatpush1.msra.mxu0 0.0
        %448 = vmatprep.subr.mxu0 0.0
        %449 = vmatpush1.msra.mxu0 0.0
        %450 = vmatprep.subr.mxu0 0.0
        %451 = vmatpush1.msra.mxu0 0.0
        %452 = vmatprep.subr.mxu0 0.0
        %453 = vmatpush1.msra.mxu0 0.0
        %454 = vmatprep.subr.mxu0 0.0
        %455 = vmatpush1.msra.mxu0 0.0
        %456 = vmatprep.subr.mxu0 0.0
        %457 = vmatpush1.msra.mxu0 0.0
        %458 = vmatprep.subr.mxu0 0.0
        %459 = vmatpush1.msra.mxu0 0.0
        %460 = vmatprep.subr.mxu0 0.0
        %461 = vmatpush1.msra.mxu0 0.0
        %462 = vmatprep.subr.mxu0 0.0
        %463 = vmatpush1.msra.mxu0 0.0
        %464 = vmatprep.subr.mxu0 0.0
        %465 = vmatpush1.msra.mxu0 0.0
        %466 = vmatprep.subr.mxu0 0.0
        %467 = vmatpush1.msra.mxu0 0.0
        %468 = vmatprep.mubr.f32.mxu0 0.0
        %469 = vmatmul.mubr.f32.gmra.mrb[0].mxu0 %v357
        %v470 = vpop.f32.mrb[0].mxu0
        %v471 = vadd.f32 %v353, %v470
        %v472 = vpop.f32.mrb[0].mxu0
        %473 = vmatprep.mubr.f32.mxu0 0.0
        %474 = vmatmul.mubr.f32.gmra.mrb[0].mxu0 %v360
        %v475 = vpop.f32.mrb[0].mxu0
        %v476 = vadd.f32 %v353, %v475
        %v477 = vpop.f32.mrb[0].mxu0
        %478 = vmatprep.mubr.f32.mxu0 0.0
        %479 = vmatmul.mubr.f32.gmra.mrb[0].mxu0 %v363
        %v480 = vpop.f32.mrb[0].mxu0
        %v481 = vadd.f32 %v353, %v480
        %v482 = vpop.f32.mrb[0].mxu0
        %483 = vmatprep.mubr.f32.mxu0 0.0
        %484 = vmatmul.mubr.f32.gmra.mrb[0].mxu0 %v366
        %v485 = vpop.f32.mrb[0].mxu0
        %v486 = vadd.f32 %v353, %v485
        %v487 = vpop.f32.mrb[0].mxu0
        %488 = vmatprep.mubr.f32.mxu0 0.0
        %489 = vmatmul.mubr.f32.gmra.mrb[0].mxu0 %v369
        %v490 = vpop.f32.mrb[0].mxu0
        %v491 = vadd.f32 %v353, %v490
        %v492 = vpop.f32.mrb[0].mxu0
        %493 = vmatprep.mubr.f32.mxu0 0.0
        %494 = vmatmul.mubr.f32.gmra.mrb[0].mxu0 %v372
        %v495 = vpop.f32.mrb[0].mxu0
        %v496 = vadd.f32 %v353, %v495
        %v497 = vpop.f32.mrb[0].mxu0
        %498 = vmatprep.mubr.f32.mxu0 0.0
        %499 = vmatmul.mubr.f32.gmra.mrb[0].mxu0 %v375
        %v500 = vpop.f32.mrb[0].mxu0
        %v501 = vadd.f32 %v353, %v500
        %v502 = vpop.f32.mrb[0].mxu0
        %503 = vmatprep.mubr.f32.mxu0 0.0
        %504 = vmatmul.mubr.f32.gmra.mrb[0].mxu0 %v378
        %v505 = vpop.f32.mrb[0].mxu0
        %v506 = vadd.f32 %v353, %v505
        %v507 = vpop.f32.mrb[0].mxu0
        %508 = vmatprep.mubr.f32.mxu0 0.0
        %509 = vmatmul.mubr.f32.gmra.mrb[0].mxu0 %v381
        %v510 = vpop.f32.mrb[0].mxu0
        %v511 = vadd.f32 %v353, %v510
        %v512 = vpop.f32.mrb[0].mxu0
        %513 = vmatprep.mubr.f32.mxu0 0.0
        %514 = vmatmul.mubr.f32.gmra.mrb[0].mxu0 %v384
        %v515 = vpop.f32.mrb[0].mxu0
        %v516 = vadd.f32 %v353, %v515
        %v517 = vpop.f32.mrb[0].mxu0
        %518 = vmatprep.mubr.f32.mxu0 0.0
        %519 = vmatmul.mubr.f32.gmra.mrb[0].mxu0 %v387
        %v520 = vpop.f32.mrb[0].mxu0
        %v521 = vadd.f32 %v353, %v520
        %v522 = vpop.f32.mrb[0].mxu0
        %523 = vmatprep.mubr.f32.mxu0 0.0
        %524 = vmatmul.mubr.f32.gmra.mrb[0].mxu0 %v390
        %v525 = vpop.f32.mrb[0].mxu0
        %v526 = vadd.f32 %v353, %v525
        %v527 = vpop.f32.mrb[0].mxu0
        %528 = vmatprep.mubr.f32.mxu0 0.0
        %529 = vmatmul.mubr.f32.gmra.mrb[0].mxu0 %v393
        %v530 = vpop.f32.mrb[0].mxu0
        %v531 = vadd.f32 %v353, %v530
        %v532 = vpop.f32.mrb[0].mxu0
        %533 = vmatprep.mubr.f32.mxu0 0.0
        %534 = vmatmul.mubr.f32.gmra.mrb[0].mxu0 %v396
        %v535 = vpop.f32.mrb[0].mxu0
        %v536 = vadd.f32 %v353, %v535
        %v537 = vpop.f32.mrb[0].mxu0
        %538 = vmatprep.mubr.f32.mxu0 0.0
        %539 = vmatmul.mubr.f32.gmra.mrb[0].mxu0 %v399
        %v540 = vpop.f32.mrb[0].mxu0
        %v541 = vadd.f32 %v353, %v540
        %v542 = vpop.f32.mrb[0].mxu0
        %543 = vmatprep.mubr.f32.mxu0 0.0
        %544 = vmatmul.mubr.f32.gmra.mrb[0].mxu0 %v402
        %v545 = vpop.f32.mrb[0].mxu0
        %v546 = vadd.f32 %v353, %v545
        %v547 = vpop.f32.mrb[0].mxu0
        %548 = vdwg.mxu0
        %v549 = vmax.f32 %v471, 0.0
        %v550 = vmax.f32 %v476, 0.0
        %v551 = vmax.f32 %v481, 0.0
        %v552 = vmax.f32 %v486, 0.0
        %v553 = vmax.f32 %v491, 0.0
        %v554 = vmax.f32 %v496, 0.0
        %v555 = vmax.f32 %v501, 0.0
        %v556 = vmax.f32 %v506, 0.0
        %v557 = vmax.f32 %v511, 0.0
        %v558 = vmax.f32 %v516, 0.0
        %v559 = vmax.f32 %v521, 0.0
        %v560 = vmax.f32 %v526, 0.0
        %v561 = vmax.f32 %v531, 0.0
        %v562 = vmax.f32 %v536, 0.0
        %v563 = vmax.f32 %v541, 0.0
        %v564 = vmax.f32 %v546, 0.0
        %v565 = vld [vmem:[%s3] sm:$0xff]
        %v566 = vld [vmem:[%s3 + $0x8] sm:$0xff]
        %v567 = vld [vmem:[%s3 + $0x10] sm:$0xff]
        %v568 = vld [vmem:[%s3 + $0x18] sm:$0xff]
        %v569 = vld [vmem:[%s3 + $0x20] sm:$0xff]
        %v570 = vld [vmem:[%s3 + $0x28] sm:$0xff]
        %v571 = vld [vmem:[%s3 + $0x30] sm:$0xff]
        %v572 = vld [vmem:[%s3 + $0x38] sm:$0xff]
        %v573 = vld [vmem:[%s3 + $0x40] sm:$0xff]
        %v574 = vld [vmem:[%s3 + $0x48] sm:$0xff]
        %v575 = vld [vmem:[%s3 + $0x50] sm:$0xff]
        %v576 = vld [vmem:[%s3 + $0x58] sm:$0xff]
        %v577 = vld [vmem:[%s3 + $0x60] sm:$0xff]
        %v578 = vld [vmem:[%s3 + $0x68] sm:$0xff]
        %v579 = vld [vmem:[%s3 + $0x70] sm:$0xff]
        %v580 = vld [vmem:[%s3 + $0x78] sm:$0xff]
        %v581 = vld [vmem:[%s4] sm:$0x1]
        %v583 = vlaneseq
        %v584 = vshrl.u32 %v583, 7
        %v585 = vsub.s32 0, %v584
        %v586 = vrot.slane %v581, %v585
        %588 = vmatprep.subr.mxu0 0.0
        %589 = vmatpush1.msra.mxu0 %v565
        %590 = vmatprep.subr.mxu0 0.0
        %591 = vmatpush1.msra.mxu0 %v566
        %592 = vmatprep.subr.mxu0 0.0
        %593 = vmatpush1.msra.mxu0 %v567
        %594 = vmatprep.subr.mxu0 0.0
        %595 = vmatpush1.msra.mxu0 %v568
        %596 = vmatprep.subr.mxu0 0.0
        %597 = vmatpush1.msra.mxu0 %v569
        %598 = vmatprep.subr.mxu0 0.0
        %599 = vmatpush1.msra.mxu0 %v570
        %600 = vmatprep.subr.mxu0 0.0
        %601 = vmatpush1.msra.mxu0 %v571
        %602 = vmatprep.subr.mxu0 0.0
        %603 = vmatpush1.msra.mxu0 %v572
        %604 = vmatprep.subr.mxu0 0.0
        %605 = vmatpush1.msra.mxu0 %v573
        %606 = vmatprep.subr.mxu0 0.0
        %607 = vmatpush1.msra.mxu0 %v574
        %608 = vmatprep.subr.mxu0 0.0
        %609 = vmatpush1.msra.mxu0 %v575
        %610 = vmatprep.subr.mxu0 0.0
        %611 = vmatpush1.msra.mxu0 %v576
        %612 = vmatprep.subr.mxu0 0.0
        %613 = vmatpush1.msra.mxu0 %v577
        %614 = vmatprep.subr.mxu0 0.0
        %615 = vmatpush1.msra.mxu0 %v578
        %616 = vmatprep.subr.mxu0 0.0
        %617 = vmatpush1.msra.mxu0 %v579
        %618 = vmatprep.subr.mxu0 0.0
        %619 = vmatpush1.msra.mxu0 %v580
        %620 = vmatprep.subr.mxu0 0.0
        %621 = vmatpush1.msra.mxu0 0.0
        %622 = vmatprep.subr.mxu0 0.0
        %623 = vmatpush1.msra.mxu0 0.0
        %624 = vmatprep.subr.mxu0 0.0
        %625 = vmatpush1.msra.mxu0 0.0
        %626 = vmatprep.subr.mxu0 0.0
        %627 = vmatpush1.msra.mxu0 0.0
        %628 = vmatprep.subr.mxu0 0.0
        %629 = vmatpush1.msra.mxu0 0.0
        %630 = vmatprep.subr.mxu0 0.0
        %631 = vmatpush1.msra.mxu0 0.0
        %632 = vmatprep.subr.mxu0 0.0
        %633 = vmatpush1.msra.mxu0 0.0
        %634 = vmatprep.subr.mxu0 0.0
        %635 = vmatpush1.msra.mxu0 0.0
        %636 = vmatprep.subr.mxu0 0.0
        %637 = vmatpush1.msra.mxu0 0.0
        %638 = vmatprep.subr.mxu0 0.0
        %639 = vmatpush1.msra.mxu0 0.0
        %640 = vmatprep.subr.mxu0 0.0
        %641 = vmatpush1.msra.mxu0 0.0
        %642 = vmatprep.subr.mxu0 0.0
        %643 = vmatpush1.msra.mxu0 0.0
        %644 = vmatprep.subr.mxu0 0.0
        %645 = vmatpush1.msra.mxu0 0.0
        %646 = vmatprep.subr.mxu0 0.0
        %647 = vmatpush1.msra.mxu0 0.0
        %648 = vmatprep.subr.mxu0 0.0
        %649 = vmatpush1.msra.mxu0 0.0
        %650 = vmatprep.subr.mxu0 0.0
        %651 = vmatpush1.msra.mxu0 0.0
        %652 = vmatprep.mubr.f32.mxu0 0.0
        %653 = vmatmul.mubr.f32.gmra.mrb[0].mxu0 %v549
        %v654 = vpop.f32.mrb[0].mxu0
        %v655 = vadd.f32 %v586, %v654
        %v656 = vpop.f32.mrb[0].mxu0
        %657 = vmatprep.mubr.f32.mxu0 0.0
        %658 = vmatmul.mubr.f32.gmra.mrb[0].mxu0 %v550
        %v659 = vpop.f32.mrb[0].mxu0
        %v660 = vadd.f32 %v586, %v659
        %v661 = vpop.f32.mrb[0].mxu0
        %662 = vmatprep.mubr.f32.mxu0 0.0
        %663 = vmatmul.mubr.f32.gmra.mrb[0].mxu0 %v551
        %v664 = vpop.f32.mrb[0].mxu0
        %v665 = vadd.f32 %v586, %v664
        %v666 = vpop.f32.mrb[0].mxu0
        %667 = vmatprep.mubr.f32.mxu0 0.0
        %668 = vmatmul.mubr.f32.gmra.mrb[0].mxu0 %v552
        %v669 = vpop.f32.mrb[0].mxu0
        %v670 = vadd.f32 %v586, %v669
        %v671 = vpop.f32.mrb[0].mxu0
        %672 = vmatprep.mubr.f32.mxu0 0.0
        %673 = vmatmul.mubr.f32.gmra.mrb[0].mxu0 %v553
        %v674 = vpop.f32.mrb[0].mxu0
        %v675 = vadd.f32 %v586, %v674
        %v676 = vpop.f32.mrb[0].mxu0
        %677 = vmatprep.mubr.f32.mxu0 0.0
        %678 = vmatmul.mubr.f32.gmra.mrb[0].mxu0 %v554
        %v679 = vpop.f32.mrb[0].mxu0
        %v680 = vadd.f32 %v586, %v679
        %v681 = vpop.f32.mrb[0].mxu0
        %682 = vmatprep.mubr.f32.mxu0 0.0
        %683 = vmatmul.mubr.f32.gmra.mrb[0].mxu0 %v555
        %v684 = vpop.f32.mrb[0].mxu0
        %v685 = vadd.f32 %v586, %v684
        %v686 = vpop.f32.mrb[0].mxu0
        %687 = vmatprep.mubr.f32.mxu0 0.0
        %688 = vmatmul.mubr.f32.gmra.mrb[0].mxu0 %v556
        %v689 = vpop.f32.mrb[0].mxu0
        %v690 = vadd.f32 %v586, %v689
        %v691 = vpop.f32.mrb[0].mxu0
        %692 = vmatprep.mubr.f32.mxu0 0.0
        %693 = vmatmul.mubr.f32.gmra.mrb[0].mxu0 %v557
        %v694 = vpop.f32.mrb[0].mxu0
        %v695 = vadd.f32 %v586, %v694
        %v696 = vpop.f32.mrb[0].mxu0
        %697 = vmatprep.mubr.f32.mxu0 0.0
        %698 = vmatmul.mubr.f32.gmra.mrb[0].mxu0 %v558
        %v699 = vpop.f32.mrb[0].mxu0
        %v700 = vadd.f32 %v586, %v699
        %v701 = vpop.f32.mrb[0].mxu0
        %702 = vmatprep.mubr.f32.mxu0 0.0
        %703 = vmatmul.mubr.f32.gmra.mrb[0].mxu0 %v559
        %v704 = vpop.f32.mrb[0].mxu0
        %v705 = vadd.f32 %v586, %v704
        %v706 = vpop.f32.mrb[0].mxu0
        %707 = vmatprep.mubr.f32.mxu0 0.0
        %708 = vmatmul.mubr.f32.gmra.mrb[0].mxu0 %v560
        %v709 = vpop.f32.mrb[0].mxu0
        %v710 = vadd.f32 %v586, %v709
        %v711 = vpop.f32.mrb[0].mxu0
        %712 = vmatprep.mubr.f32.mxu0 0.0
        %713 = vmatmul.mubr.f32.gmra.mrb[0].mxu0 %v561
        %v714 = vpop.f32.mrb[0].mxu0
        %v715 = vadd.f32 %v586, %v714
        %v716 = vpop.f32.mrb[0].mxu0
        %717 = vmatprep.mubr.f32.mxu0 0.0
        %718 = vmatmul.mubr.f32.gmra.mrb[0].mxu0 %v562
        %v719 = vpop.f32.mrb[0].mxu0
        %v720 = vadd.f32 %v586, %v719
        %v721 = vpop.f32.mrb[0].mxu0
        %722 = vmatprep.mubr.f32.mxu0 0.0
        %723 = vmatmul.mubr.f32.gmra.mrb[0].mxu0 %v563
        %v724 = vpop.f32.mrb[0].mxu0
        %v725 = vadd.f32 %v586, %v724
        %v726 = vpop.f32.mrb[0].mxu0
        %727 = vmatprep.mubr.f32.mxu0 0.0
        %728 = vmatmul.mubr.f32.gmra.mrb[0].mxu0 %v564
        %v729 = vpop.f32.mrb[0].mxu0
        %v730 = vadd.f32 %v586, %v729
        %v731 = vpop.f32.mrb[0].mxu0
        %732 = vdwg.mxu0
        %v733 = vmax.f32 %v655, 0.0
        %v734 = vmax.f32 %v660, 0.0
        %v735 = vmax.f32 %v665, 0.0
        %v736 = vmax.f32 %v670, 0.0
        %v737 = vmax.f32 %v675, 0.0
        %v738 = vmax.f32 %v680, 0.0
        %v739 = vmax.f32 %v685, 0.0
        %v740 = vmax.f32 %v690, 0.0
        %v741 = vmax.f32 %v695, 0.0
        %v742 = vmax.f32 %v700, 0.0
        %v743 = vmax.f32 %v705, 0.0
        %v744 = vmax.f32 %v710, 0.0
        %v745 = vmax.f32 %v715, 0.0
        %v746 = vmax.f32 %v720, 0.0
        %v747 = vmax.f32 %v725, 0.0
        %v748 = vmax.f32 %v730, 0.0
        %v749 = vld [vmem:[%s5] sm:$0x1]
        %s750 = sld [smem:[#allocation2]]
        %v751 = vstv %s750
        %752 = vmatprep.subr.mxu0 0.0
        %753 = vmatpush1.xpose.msra.mxu0 %v733
        %754 = vmatprep.subr.mxu0 0.0
        %755 = vmatpush1.xpose.msra.mxu0 %v734
        %756 = vmatprep.subr.mxu0 0.0
        %757 = vmatpush1.xpose.msra.mxu0 %v735
        %758 = vmatprep.subr.mxu0 0.0
        %759 = vmatpush1.xpose.msra.mxu0 %v736
        %760 = vmatprep.subr.mxu0 0.0
        %761 = vmatpush1.xpose.msra.mxu0 %v737
        %762 = vmatprep.subr.mxu0 0.0
        %763 = vmatpush1.xpose.msra.mxu0 %v738
        %764 = vmatprep.subr.mxu0 0.0
        %765 = vmatpush1.xpose.msra.mxu0 %v739
        %766 = vmatprep.subr.mxu0 0.0
        %767 = vmatpush1.xpose.msra.mxu0 %v740
        %768 = vmatprep.subr.mxu0 0.0
        %769 = vmatpush1.xpose.msra.mxu0 %v741
        %770 = vmatprep.subr.mxu0 0.0
        %771 = vmatpush1.xpose.msra.mxu0 %v742
        %772 = vmatprep.subr.mxu0 0.0
        %773 = vmatpush1.xpose.msra.mxu0 %v743
        %774 = vmatprep.subr.mxu0 0.0
        %775 = vmatpush1.xpose.msra.mxu0 %v744
        %776 = vmatprep.subr.mxu0 0.0
        %777 = vmatpush1.xpose.msra.mxu0 %v745
        %778 = vmatprep.subr.mxu0 0.0
        %779 = vmatpush1.xpose.msra.mxu0 %v746
        %780 = vmatprep.subr.mxu0 0.0
        %781 = vmatpush1.xpose.msra.mxu0 %v747
        %782 = vmatprep.subr.mxu0 0.0
        %783 = vmatpush1.xpose.msra.mxu0 %v748
        %784 = vmatprep.subr.mxu0 0.0
        %785 = vmatpush1.xpose.msra.mxu0 0.0
        %786 = vmatprep.subr.mxu0 0.0
        %787 = vmatpush1.xpose.msra.mxu0 0.0
        %788 = vmatprep.subr.mxu0 0.0
        %789 = vmatpush1.xpose.msra.mxu0 0.0
        %790 = vmatprep.subr.mxu0 0.0
        %791 = vmatpush1.xpose.msra.mxu0 0.0
        %792 = vmatprep.subr.mxu0 0.0
        %793 = vmatpush1.xpose.msra.mxu0 0.0
        %794 = vmatprep.subr.mxu0 0.0
        %795 = vmatpush1.xpose.msra.mxu0 0.0
        %796 = vmatprep.subr.mxu0 0.0
        %797 = vmatpush1.xpose.msra.mxu0 0.0
        %798 = vmatprep.subr.mxu0 0.0
        %799 = vmatpush1.xpose.msra.mxu0 0.0
        %800 = vmatprep.subr.mxu0 0.0
        %801 = vmatpush1.xpose.msra.mxu0 0.0
        %802 = vmatprep.subr.mxu0 0.0
        %803 = vmatpush1.xpose.msra.mxu0 0.0
        %804 = vmatprep.subr.mxu0 0.0
        %805 = vmatpush1.xpose.msra.mxu0 0.0
        %806 = vmatprep.subr.mxu0 0.0
        %807 = vmatpush1.xpose.msra.mxu0 0.0
        %808 = vmatprep.subr.mxu0 0.0
        %809 = vmatpush1.xpose.msra.mxu0 0.0
        %810 = vmatprep.subr.mxu0 0.0
        %811 = vmatpush1.xpose.msra.mxu0 0.0
        %812 = vmatprep.subr.mxu0 0.0
        %813 = vmatpush1.xpose.msra.mxu0 0.0
        %814 = vmatprep.subr.mxu0 0.0
        %815 = vmatpush1.xpose.msra.mxu0 0.0
        %816 = vmatprep.mubr.f32.mxu0 0.0
        %817 = vmatmul.mubr.f32.gmra.mrb[0].mxu0 %v749
        %v818 = vpop.f32.mrb[0].mxu0
        %v819 = vadd.f32 %v751, %v818
        %v820 = vpop.f32.mrb[0].mxu0
        %821 = vdwg.mxu0
        %s822 = sld [smem:[#allocation2 + $0x1]]
        %s823 = sld [smem:[#allocation2 + $0x2]]
        %v824 = vstv %s822
        %v825 = vmax.f32 %v824, %v819
        %v826 = vstv %s823
        %v827 = vmin.f32 %v826, %v825
        %828 = vst [vmem:[%s297] sm:$0x1] %v827
        %s829 = sand.u32 %s182, 1
        %s830 = scalar_lea.sflag [#allocation3], %s829
        %s831 = sand.u32 %s182, 1
        %s832 = scalar_lea.vmem [#allocation5], %s831
        // Predicated region
        $region53: #{critic_forward.1} parent=47 // pred_check
          %p833 = pneg %p192
        $region54: #{critic_forward.1} parent=47 // pred_check_branch
          %835 = sbr.rel (%p833) target = $region56
        $region55: #{critic_forward.1} parent=47 // pred_region
          %s837 = ssub.s32 16, 16
          %838 = vsyncadd %s830, %s837
          %s839 = smul.addr %s22, 16
          %s840 = scalar_lea.hbm %s7, %s839
          %s842 = sshll.u32 %s832, 4
          %s843 = int_to_ptr.vmem [resolvable:$true] %s842
          %845 = dma.vmem_to_hbm [thread:$0]  %s843, 16, %s840, %s830
        $region56: #{critic_forward.1} parent=47 // pred_fallthru
          _
      $region48: #{critic_forward.1} parent=5 // pred_fallthru
        _
      %p846 = scmp.le.s32.totalorder 2, %s17
      // Predicated region
      $region57: #{critic_forward.1} parent=5 // pred_check
        %p847 = pneg %p846
      $region58: #{critic_forward.1} parent=5 // pred_check_branch
        %849 = sbr.rel (%p847) target = $region60
      $region59: #{critic_forward.1} parent=5 // pred_region
        %s850 = ssub.s32 %s17, 2
        // Predicated region
        $region61: #{critic_forward.1} parent=59 // pred_check
          %p851 = pneg %p198
        $region62: #{critic_forward.1} parent=59 // pred_check_branch
          %853 = sbr.rel (%p851) target = $region64
        $region63: #{critic_forward.1} parent=59 // pred_region
          %s854 = sand.u32 %s183, 1
          %s855 = scalar_lea.sflag [#allocation3], %s854
          %s856 = sand.u32 %s183, 1
          %s857 = scalar_lea.vmem [#allocation5], %s856
          %858 = dma.done %s855, 16
        $region64: #{critic_forward.1} parent=59 // pred_fallthru
          _
      $region60: #{critic_forward.1} parent=5 // pred_fallthru
        _
    $region6: #{critic_forward.1} parent=1 // loop_footer
      %s21 = sadd.s32 1, %s17
    $region7: #{critic_forward.1} parent=1 // loop_footer_branch
      %16 = sbr.rel target = $region3
    $region8: #{critic_forward.1} parent=1 // loop_exit
      _
    %859 = vsyncpa [#allocation3], 1
    %s860 = scalar_lea.sflag [#allocation3], 1
    %861 = vsyncpa %s860, 1
    %862 = vsyncpa [#allocation4], 1
    %s863 = scalar_lea.sflag [#allocation4], 1
    %864 = vsyncpa %s863, 1

</llo_original>
